<compile_context>
chip_gen: v7x
topology: tpu7x:2x2x1
jax: 0.10.0
libtpu: 0.0.40
codegen_flags: <defaults>
</compile_context>

<pallas_src>
import jax
import jax.numpy as jnp
from jax.experimental import pallas as pl
from jax.experimental.pallas import tpu as pltpu

# Static layer dimensions implied by the module (input 3x8x8 -> 2*2*64 -> 100 -> 2).
D0 = 3 * 8 * 8          # 192  flat input (NCHW order); block uses full array dim
D1 = 4 * 4 * 16         # 256  conv1 output flattened NHWC (lane dense)
D2 = 2 * 2 * 64         # 256  conv2 output flattened in PyTorch NCHW order
D3 = 100                # fc1 out (folded offline into fc2)
D4, D4P = 2, 128        # final output, padded to lane width
TB_CAP = 1024           # max batch tile; working set stays well inside VMEM


# ----------------------------------------------------------------------------
# Fused forward kernel: 3 chained bf16 MXU matmuls, f32 accumulate + epilogues.
# ----------------------------------------------------------------------------
def _fused_forward_kernel(x_ref, m1_ref, m2_ref, w34_ref, bias_ref, o_ref):
    x = x_ref[...].astype(jnp.bfloat16)
    # conv1 + BN1 (folded) + ReLU   (conv lowered to a dense matrix offline)
    y1 = jnp.dot(x, m1_ref[...], preferred_element_type=jnp.float32)
    y1 = jnp.maximum(y1 + bias_ref[0:1, :], 0.0).astype(jnp.bfloat16)
    # conv2 + BN2 (folded) + ReLU   (columns already in PyTorch NCHW order)
    y2 = jnp.dot(y1, m2_ref[...], preferred_element_type=jnp.float32)
    y2 = jnp.maximum(y2 + bias_ref[1:2, :], 0.0).astype(jnp.bfloat16)
    # fc1 -> dropout (identity in eval) -> fc2, folded into one matmul offline
    # TODO(synk): training-mode dropout (p=0.5 mask + 2x scale) not implemented.
    y4 = jnp.dot(y2, w34_ref[...], preferred_element_type=jnp.float32)
    o_ref[...] = (y4 + bias_ref[2:3, 0:D4P]).astype(o_ref.dtype)


def _choose_tiling(B):
    """Return (padded_batch, tile). >=2 tiles when B > 8 (v7x megacore), tile<=1024."""
    Bp = -(-B // 8) * 8
    if Bp <= 8:
        return Bp, Bp
    tb = min(TB_CAP, max(8, (Bp // 2) // 8 * 8))
    Bp = -(-Bp // tb) * tb
    return Bp, tb


def mymodel_forward(x_nchw, prep):
    """x_nchw: (B, 3, 8, 8) float32. prep: output of prepare_params(). -> (B, 2)."""
    B = x_nchw.shape[0]
    Bp, TB = _choose_tiling(B)
    grid_m = Bp // TB

    # PyTorch NCHW flatten is a free reshape; pad only the batch remainder
    # (no column pad, no full-activation copy when B is already aligned).
    x_flat = x_nchw.reshape(B, D0).astype(jnp.float32)
    if Bp != B:
        x_flat = jnp.pad(x_flat, ((0, Bp - B), (0, 0)))

    matmul_macs = D0 * D1 + D1 * D2 + D2 * D4P
    cost = pl.CostEstimate(
        flops=2 * Bp * matmul_macs,
        transcendentals=0,
        bytes_accessed=(Bp * D0 * 4            # f32 input
                        + 2 * matmul_macs      # bf16 weights
                        + 8 * D1 * 4           # packed biases
                        + Bp * D4P * 4),       # f32 output
    )

    out = pl.pallas_call(
        _fused_forward_kernel,
        out_shape=jax.ShapeDtypeStruct((Bp, D4P), jnp.float32),
        grid=(grid_m,),
        in_specs=[
            pl.BlockSpec((TB, D0), lambda i: (i, 0)),   # activations (f32)
            pl.BlockSpec((D0, D1), lambda i: (0, 0)),   # conv1-as-dense (bf16)
            pl.BlockSpec((D1, D2), lambda i: (0, 0)),   # conv2-as-dense (bf16)
            pl.BlockSpec((D2, D4P), lambda i: (0, 0)),  # fused fc1·fc2 (bf16)
            pl.BlockSpec((8, D1), lambda i: (0, 0)),    # packed biases (f32)
        ],
        out_specs=pl.BlockSpec((TB, D4P), lambda i: (i, 0)),
        compiler_params=pltpu.CompilerParams(
            dimension_semantics=("parallel",)),
        cost_estimate=cost,
    )(x_flat, prep["m1"], prep["m2"], prep["w34"], prep["bias"])

    return out[:B, :D4]


# ----------------------------------------------------------------------------
# One-time parameter preparation (constant folding; NOT in the hot path).
# ----------------------------------------------------------------------------
def _extract_patches_nhwc(x_nhwc, ksize=3, stride=2, pad=1):
    """(B,H,W,C) -> (B*OH*OW, KH*KW*C) with (kh, kw, c) minor ordering."""
    B, H, W, C = x_nhwc.shape
    xp = jnp.pad(x_nhwc, ((0, 0), (pad, pad), (pad, pad), (0, 0)))
    OH = (H + 2 * pad - ksize) // stride + 1
    OW = (W + 2 * pad - ksize) // stride + 1
    cols = []
    for kh in range(ksize):
        for kw in range(ksize):
            cols.append(xp[:, kh:kh + stride * OH:stride,
                           kw:kw + stride * OW:stride, :])
    patches = jnp.stack(cols, axis=3)                   # (B, OH, OW, KH*KW, C)
    return patches.reshape(B * OH * OW, ksize * ksize * C), OH, OW


def _fold_conv_bn(w_oihw, b_conv, gamma, beta, mean, var, eps=1e-5):
    """Fold eval-mode BatchNorm into conv weights/bias.

    Returns (W_mat, b_eff): W_mat is (KH*KW*Cin, Cout) in (kh,kw,cin) order.
    """
    scale = gamma / jnp.sqrt(var + eps)
    w_mat = jnp.transpose(w_oihw, (2, 3, 1, 0)).reshape(-1, w_oihw.shape[0])
    w_mat = w_mat * scale[None, :]
    b_eff = (b_conv - mean) * scale + beta
    return w_mat, b_eff


def _conv_as_dense(w_mat, H, W, Cin, ksize=3, stride=2, pad=1):
    """Dense M (H*W*Cin, OH*OW*Cout) s.t. flat_nhwc(conv(x)) = flat_nhwc(x) @ M."""
    n_in = H * W * Cin
    eye = jnp.eye(n_in, dtype=jnp.float32).reshape(n_in, H, W, Cin)
    patches, OH, OW = _extract_patches_nhwc(eye, ksize, stride, pad)
    out = patches @ w_mat                               # (n_in*OH*OW, Cout)
    return out.reshape(n_in, OH * OW * w_mat.shape[1]), OH, OW


def prepare_params(params):
    """Fold BN, lower convs to dense, fold fc1·fc2, bake layouts, pack biases."""
    # conv1 + bn1
    w1_mat, b1_eff = _fold_conv_bn(params["conv1_w"], params["conv1_b"],
                                   params["bn1_gamma"], params["bn1_beta"],
                                   params["bn1_mean"], params["bn1_var"])
    m1, oh1, ow1 = _conv_as_dense(w1_mat, 8, 8, 3)      # (192, 256) NHWC-in/out
    # re-index rows from NHWC-flat to NCHW-flat so x.reshape(B,-1) feeds it directly
    m1 = m1.reshape(8, 8, 3, oh1 * ow1 * 16).transpose(2, 0, 1, 3).reshape(D0, D1)
    b1 = jnp.tile(b1_eff, oh1 * ow1)                    # (256,), NHWC column order

    # conv2 + bn2
    w2_mat, b2_eff = _fold_conv_bn(params["conv2_w"], params["conv2_b"],
                                   params["bn2_gamma"], params["bn2_beta"],
                                   params["bn2_mean"], params["bn2_var"])
    m2, oh2, ow2 = _conv_as_dense(w2_mat, 4, 4, 16)     # (256, 256) NHWC-in/out
    # re-index columns to PyTorch NCHW flatten order (c, h, w)
    m2 = m2.reshape(D1, oh2, ow2, 64).transpose(0, 3, 1, 2).reshape(D1, D2)
    b2 = jnp.repeat(b2_eff, oh2 * ow2)                  # (256,), NCHW column order

    # fc1 -> dropout(identity, eval) -> fc2 folded into one linear layer
    w3 = params["fc1_w"].T                              # (256, 100)
    w4 = params["fc2_w"].T                              # (100, 2)
    w34 = w3 @ w4                                       # (256, 2)
    b34 = params["fc1_b"] @ w4 + params["fc2_b"]        # (2,)

    # Pack all biases into one (8, 256) f32 array -> single aligned DMA.
    bias = jnp.stack([b1, b2, jnp.pad(b34, (0, D1 - D4))], axis=0)
    bias = jnp.pad(bias, ((0, 8 - bias.shape[0]), (0, 0)))

    return {
        "m1": m1.astype(jnp.bfloat16),
        "m2": m2.astype(jnp.bfloat16),
        "w34": jnp.pad(w34, ((0, 0), (0, D4P - D4))).astype(jnp.bfloat16),
        "bias": bias.astype(jnp.float32),
    }


# ----------------------------------------------------------------------------
# Pure-JAX f32 reference (per-layer im2col), ground truth for validation.
# ----------------------------------------------------------------------------
def _reference_forward(x_nchw, params):
    B = x_nchw.shape[0]
    x = jnp.transpose(x_nchw, (0, 2, 3, 1))
    w1, b1 = _fold_conv_bn(params["conv1_w"], params["conv1_b"],
                           params["bn1_gamma"], params["bn1_beta"],
                           params["bn1_mean"], params["bn1_var"])
    p1, oh1, ow1 = _extract_patches_nhwc(x)
    y1 = jnp.maximum(p1 @ w1 + b1, 0.0).reshape(B, oh1, ow1, 16)
    w2, b2 = _fold_conv_bn(params["conv2_w"], params["conv2_b"],
                           params["bn2_gamma"], params["bn2_beta"],
                           params["bn2_mean"], params["bn2_var"])
    p2, oh2, ow2 = _extract_patches_nhwc(y1)
    y2 = jnp.maximum(p2 @ w2 + b2, 0.0).reshape(B, oh2, ow2, 64)
    flat = jnp.transpose(y2, (0, 3, 1, 2)).reshape(B, -1)
    y3 = flat @ params["fc1_w"].T + params["fc1_b"]
    return y3 @ params["fc2_w"].T + params["fc2_b"]


# ----------------------------------------------------------------------------
# Deterministic synthetic parameters (shapes match the nn.Module __init__)
# ----------------------------------------------------------------------------
def init_params(key):
    ks = jax.random.split(key, 8)
    return {
        "conv1_w": 0.1 * jax.random.normal(ks[0], (16, 3, 3, 3), jnp.float32),
        "conv1_b": 0.1 * jax.random.normal(ks[1], (16,), jnp.float32),
        "bn1_gamma": jnp.ones((16,), jnp.float32),
        "bn1_beta": jnp.zeros((16,), jnp.float32),
        "bn1_mean": 0.05 * jnp.arange(16, dtype=jnp.float32),
        "bn1_var": jnp.ones((16,), jnp.float32) + 0.01 * jnp.arange(16, dtype=jnp.float32),
        "conv2_w": 0.1 * jax.random.normal(ks[2], (64, 16, 3, 3), jnp.float32),
        "conv2_b": 0.1 * jax.random.normal(ks[3], (64,), jnp.float32),
        "bn2_gamma": jnp.ones((64,), jnp.float32),
        "bn2_beta": jnp.zeros((64,), jnp.float32),
        "bn2_mean": 0.02 * jnp.arange(64, dtype=jnp.float32),
        "bn2_var": jnp.ones((64,), jnp.float32) + 0.005 * jnp.arange(64, dtype=jnp.float32),
        "fc1_w": 0.05 * jax.random.normal(ks[4], (100, 2 * 2 * 64), jnp.float32),
        "fc1_b": 0.05 * jax.random.normal(ks[5], (100,), jnp.float32),
        "fc2_w": 0.05 * jax.random.normal(ks[6], (2, 100), jnp.float32),
        "fc2_b": 0.05 * jax.random.normal(ks[7], (2,), jnp.float32),
    }


if __name__ == "__main__":
    key = jax.random.PRNGKey(0)
    k_x, k_p = jax.random.split(key)
    params = init_params(k_p)
    prep = prepare_params(params)                # one-time weight preparation
    fwd = jax.jit(mymodel_forward)

    # Canonical small test: batch=2, 3 channels, 8x8 spatial -> (2, 2) output.
    x = jax.random.normal(k_x, (2, 3, 8, 8), jnp.float32)
    out = jax.block_until_ready(fwd(x, prep))
    assert out.shape == (2, 2), out.shape
    ref = _reference_forward(x, params)
    err = float(jnp.max(jnp.abs(out - ref)))
    # bf16 MXU path (f32 accumulate): tolerance deliberately loosened from 1e-3.
    assert err < 3e-2, f"max abs err vs reference (B=2): {err}"

    # Ragged / multi-tile batch exercises the parallel grid + remainder padding.
    x2 = jax.random.normal(jax.random.PRNGKey(1), (20, 3, 8, 8), jnp.float32)
    out2 = jax.block_until_ready(fwd(x2, prep))
    assert out2.shape == (20, 2), out2.shape
    ref2 = _reference_forward(x2, params)
    err2 = float(jnp.max(jnp.abs(out2 - ref2)))
    assert err2 < 3e-2, f"max abs err vs reference (B=20): {err2}"

    print("KERNEL_OK")
</pallas_src>

<mosaic_0001>
module attributes {stable_mosaic.version = 11 : i64} {
  func.func @_fused_forward_kernel(%arg0: i32, %arg1: memref<8x192xf32, #tpu.memory_space<vmem>>, %arg2: memref<192x256xbf16, #tpu.memory_space<vmem>>, %arg3: memref<256x256xbf16, #tpu.memory_space<vmem>>, %arg4: memref<256x128xbf16, #tpu.memory_space<vmem>>, %arg5: memref<8x256xf32, #tpu.memory_space<vmem>>, %arg6: memref<8x128xf32, #tpu.memory_space<vmem>>) attributes {dimension_semantics = [#tpu.dimension_semantics<parallel>], iteration_bounds = array<i64: 1>, scalar_prefetch = 0 : i64, scratch_operands = 0 : i64, tpu.core_type = #tpu.core_type<tc>, window_params = [{transform_indices = @transform_0, window_bounds = array<i64: 8, 192>}, {pipeline_mode = #tpu.pipeline_mode<synchronous>, transform_indices = @transform_1, window_bounds = array<i64: 192, 256>}, {pipeline_mode = #tpu.pipeline_mode<synchronous>, transform_indices = @transform_2, window_bounds = array<i64: 256, 256>}, {pipeline_mode = #tpu.pipeline_mode<synchronous>, transform_indices = @transform_3, window_bounds = array<i64: 256, 128>}, {pipeline_mode = #tpu.pipeline_mode<synchronous>, transform_indices = @transform_4, window_bounds = array<i64: 8, 256>}, {transform_indices = @transform_5, window_bounds = array<i64: 8, 128>}]} {
    %c0 = arith.constant 0 : index
    %c0_0 = arith.constant 0 : index
    %0 = vector.load %arg1[%c0, %c0_0] : memref<8x192xf32, #tpu.memory_space<vmem>>, vector<8x192xf32>
    %1 = arith.truncf %0 : vector<8x192xf32> to vector<8x192xbf16>
    %c0_1 = arith.constant 0 : index
    %c0_2 = arith.constant 0 : index
    %2 = vector.load %arg2[%c0_1, %c0_2] : memref<192x256xbf16, #tpu.memory_space<vmem>>, vector<192x256xbf16>
    %cst = arith.constant dense<0.000000e+00> : vector<8x256xf32>
    %3 = tpu.matmul %1, %2, %cst {dimension_numbers = #tpu.dot_dimension_numbers<[1], [0], [0], [1], [0, 0, 1, 1], [], []>} : vector<8x192xbf16>, vector<192x256xbf16>, vector<8x256xf32> -> vector<8x256xf32>
    %c0_3 = arith.constant 0 : index
    %c0_4 = arith.constant 0 : index
    %4 = vector.load %arg5[%c0_3, %c0_4] : memref<8x256xf32, #tpu.memory_space<vmem>>, vector<1x256xf32>
    %5 = vector.broadcast %4 : vector<1x256xf32> to vector<8x256xf32>
    %6 = arith.addf %3, %5 : vector<8x256xf32>
    %cst_5 = arith.constant 0.000000e+00 : f32
    %7 = vector.broadcast %cst_5 : f32 to vector<8x256xf32>
    %8 = arith.maximumf %6, %7 : vector<8x256xf32>
    %9 = arith.truncf %8 : vector<8x256xf32> to vector<8x256xbf16>
    %c0_6 = arith.constant 0 : index
    %c0_7 = arith.constant 0 : index
    %10 = vector.load %arg3[%c0_6, %c0_7] : memref<256x256xbf16, #tpu.memory_space<vmem>>, vector<256x256xbf16>
    %cst_8 = arith.constant dense<0.000000e+00> : vector<8x256xf32>
    %11 = tpu.matmul %9, %10, %cst_8 {dimension_numbers = #tpu.dot_dimension_numbers<[1], [0], [0], [1], [0, 0, 1, 1], [], []>} : vector<8x256xbf16>, vector<256x256xbf16>, vector<8x256xf32> -> vector<8x256xf32>
    %c1 = arith.constant 1 : index
    %c0_9 = arith.constant 0 : index
    %12 = vector.load %arg5[%c1, %c0_9] : memref<8x256xf32, #tpu.memory_space<vmem>>, vector<1x256xf32>
    %13 = vector.broadcast %12 : vector<1x256xf32> to vector<8x256xf32>
    %14 = arith.addf %11, %13 : vector<8x256xf32>
    %cst_10 = arith.constant 0.000000e+00 : f32
    %15 = vector.broadcast %cst_10 : f32 to vector<8x256xf32>
    %16 = arith.maximumf %14, %15 : vector<8x256xf32>
    %17 = arith.truncf %16 : vector<8x256xf32> to vector<8x256xbf16>
    %c0_11 = arith.constant 0 : index
    %c0_12 = arith.constant 0 : index
    %18 = vector.load %arg4[%c0_11, %c0_12] : memref<256x128xbf16, #tpu.memory_space<vmem>>, vector<256x128xbf16>
    %cst_13 = arith.constant dense<0.000000e+00> : vector<8x128xf32>
    %19 = tpu.matmul %17, %18, %cst_13 {dimension_numbers = #tpu.dot_dimension_numbers<[1], [0], [0], [1], [0, 0, 1, 1], [], []>} : vector<8x256xbf16>, vector<256x128xbf16>, vector<8x128xf32> -> vector<8x128xf32>
    %c2 = arith.constant 2 : index
    %c0_14 = arith.constant 0 : index
    %20 = vector.load %arg5[%c2, %c0_14] : memref<8x256xf32, #tpu.memory_space<vmem>>, vector<1x128xf32>
    %21 = vector.broadcast %20 : vector<1x128xf32> to vector<8x128xf32>
    %22 = arith.addf %19, %21 : vector<8x128xf32>
    %c0_15 = arith.constant 0 : index
    %c0_16 = arith.constant 0 : index
    %23 = vector.load %arg6[%c0_15, %c0_16] : memref<8x128xf32, #tpu.memory_space<vmem>>, vector<8x128xf32>
    tpu.vector_store %arg6[%c0_15, %c0_16], %22 {strides = array<i32>} : memref<8x128xf32, #tpu.memory_space<vmem>>, vector<8x128xf32>,
    return
  }
  func.func @transform_0(%arg0: i32) -> (i32, i32) {
    %c0_i32 = arith.constant 0 : i32
    %c0_i32_0 = arith.constant 0 : i32
    return %arg0, %c0_i32 : i32, i32
  }
  func.func @transform_1(%arg0: i32) -> (i32, i32) {
    %c0_i32 = arith.constant 0 : i32
    %c0_i32_0 = arith.constant 0 : i32
    %c0_i32_1 = arith.constant 0 : i32
    return %c0_i32, %c0_i32_0 : i32, i32
  }
  func.func @transform_2(%arg0: i32) -> (i32, i32) {
    %c0_i32 = arith.constant 0 : i32
    %c0_i32_0 = arith.constant 0 : i32
    %c0_i32_1 = arith.constant 0 : i32
    return %c0_i32, %c0_i32_0 : i32, i32
  }
  func.func @transform_3(%arg0: i32) -> (i32, i32) {
    %c0_i32 = arith.constant 0 : i32
    %c0_i32_0 = arith.constant 0 : i32
    %c0_i32_1 = arith.constant 0 : i32
    return %c0_i32, %c0_i32_0 : i32, i32
  }
  func.func @transform_4(%arg0: i32) -> (i32, i32) {
    %c0_i32 = arith.constant 0 : i32
    %c0_i32_0 = arith.constant 0 : i32
    %c0_i32_1 = arith.constant 0 : i32
    return %c0_i32, %c0_i32_0 : i32, i32
  }
  func.func @transform_5(%arg0: i32) -> (i32, i32) {
    %c0_i32 = arith.constant 0 : i32
    %c0_i32_0 = arith.constant 0 : i32
    return %arg0, %c0_i32 : i32, i32
  }
}

</mosaic_0001>

<llo_original>
// kernel: mymodel_forward.1
$region0: #{mymodel_forward.1}
  #allocation0 [shape = 'u32[]', space=smem, size = 0x4, offset = 0x4, fixed_abs, tag = 'smem constant byte address 0x4 - core index']
  #allocation1 [shape = 'u32[144,128]{1,0:T(1,128)}', space=vmem, size = 0x12000, scoped, tag = 'internal scratch']
  %s0 = inlined_call_operand.vmem [shape: f32[8,192], index: 0, kind: input, shape index: {}]
  %s1 = inlined_call_operand.hbm [shape: bf16[192,256], index: 1, kind: input, shape index: {}]
  %s2 = inlined_call_operand.hbm [shape: bf16[256,256], index: 2, kind: input, shape index: {}]
  %s3 = inlined_call_operand.hbm [shape: bf16[256,128], index: 3, kind: input, shape index: {}]
  %s4 = inlined_call_operand.vmem [shape: f32[8,256], index: 4, kind: input, shape index: {}]
  %s5 = inlined_call_operand.vmem [shape: f32[8,128], index: 5, kind: output, shape index: {}]
  %s6 = sld [smem:[#allocation0]]
  $region42: #{mymodel_forward.1} parent=0
    _
  %s8 = ssub.s32 1, %s6
  %s9 = scalar_select 0, %s8, %s6
  $region1: #{mymodel_forward.1} parent=0
    #allocation2 [shape = 'u8[98304]{0}', space=vmem, size = 0x18000, scoped, tag = 'input window, operand 1, single buffered']
    #allocation3 [shape = 's32[1]{0}', space=sflag, size = 0x4, scoped, tag = 'scoped memory for mymodel_forward.1']
    #allocation4 [shape = 'u8[131072]{0}', space=vmem, size = 0x20000, scoped, tag = 'input window, operand 2, single buffered']
    #allocation5 [shape = 's32[1]{0}', space=sflag, size = 0x4, scoped, tag = 'scoped memory for mymodel_forward.1']
    #allocation6 [shape = 'u8[65536]{0}', space=vmem, size = 0x10000, scoped, tag = 'input window, operand 3, single buffered']
    %10 = vsyncpa [#allocation3], 0
    %11 = vsyncpa [#allocation5], 0
    // Predicated region
    $region2: #{mymodel_forward.1} parent=1 // pred_check
      _
    $region3: #{mymodel_forward.1} parent=1 // pred_check_branch
      %13 = sbr.rel (0) target = $region5
    $region4: #{mymodel_forward.1} parent=1 // pred_region
      _
    $region5: #{mymodel_forward.1} parent=1 // pred_fallthru
      _
    // Predicated region
    $region6: #{mymodel_forward.1} parent=1 // pred_check
      _
    $region7: #{mymodel_forward.1} parent=1 // pred_check_branch
      %15 = sbr.rel (0) target = $region9
    $region8: #{mymodel_forward.1} parent=1 // pred_region
      %s17 = ssub.s32 3072, 3072
      %18 = vsyncadd [#allocation3], %s17
      %s19 = sshll.u32 [#allocation2], 4
      %s20 = int_to_ptr.vmem [resolvable:$true] %s19
      %25 = dma.hbm_to_vmem [thread:$0]  %s1, 3072, %s20, [#allocation3], 128, 128, 8
    $region9: #{mymodel_forward.1} parent=1 // pred_fallthru
      _
    // Predicated region
    $region10: #{mymodel_forward.1} parent=1 // pred_check
      _
    $region11: #{mymodel_forward.1} parent=1 // pred_check_branch
      %27 = sbr.rel (0) target = $region13
    $region12: #{mymodel_forward.1} parent=1 // pred_region
      %s29 = ssub.s32 4096, 4096
      %30 = vsyncadd [#allocation5], %s29
      %s31 = sshll.u32 [#allocation4], 4
      %s32 = int_to_ptr.vmem [resolvable:$true] %s31
      %37 = dma.hbm_to_vmem [thread:$0]  %s2, 4096, %s32, [#allocation5], 128, 128, 8
    $region13: #{mymodel_forward.1} parent=1 // pred_fallthru
      _
    // Predicated region
    $region14: #{mymodel_forward.1} parent=1 // pred_check
      _
    $region15: #{mymodel_forward.1} parent=1 // pred_check_branch
      %39 = sbr.rel (0) target = $region17
    $region16: #{mymodel_forward.1} parent=1 // pred_region
      %s41 = ssub.s32 2048, 2048
      %42 = vsyncadd [#allocation5], %s41
      %s43 = sshll.u32 [#allocation6], 4
      %s44 = int_to_ptr.vmem [resolvable:$true] %s43
      %49 = dma.hbm_to_vmem [thread:$0]  %s3, 2048, %s44, [#allocation5], 64, 64, 4
    $region17: #{mymodel_forward.1} parent=1 // pred_fallthru
      _
    // Predicated region
    $region18: #{mymodel_forward.1} parent=1 // pred_check
      _
    $region19: #{mymodel_forward.1} parent=1 // pred_check_branch
      %51 = sbr.rel (0) target = $region21
    $region20: #{mymodel_forward.1} parent=1 // pred_region
      _
    $region21: #{mymodel_forward.1} parent=1 // pred_fallthru
      _
    // Predicated region
    $region22: #{mymodel_forward.1} parent=1 // pred_check
      _
    $region23: #{mymodel_forward.1} parent=1 // pred_check_branch
      %53 = sbr.rel (0) target = $region25
    $region24: #{mymodel_forward.1} parent=1 // pred_region
      %54 = dma.done [#allocation3], 3072
    $region25: #{mymodel_forward.1} parent=1 // pred_fallthru
      _
    // Predicated region
    $region26: #{mymodel_forward.1} parent=1 // pred_check
      _
    $region27: #{mymodel_forward.1} parent=1 // pred_check_branch
      %56 = sbr.rel (0) target = $region29
    $region28: #{mymodel_forward.1} parent=1 // pred_region
      %57 = dma.done [#allocation5], 4096
    $region29: #{mymodel_forward.1} parent=1 // pred_fallthru
      _
    // Predicated region
    $region30: #{mymodel_forward.1} parent=1 // pred_check
      _
    $region31: #{mymodel_forward.1} parent=1 // pred_check_branch
      %59 = sbr.rel (0) target = $region33
    $region32: #{mymodel_forward.1} parent=1 // pred_region
      %60 = dma.done [#allocation5], 2048
    $region33: #{mymodel_forward.1} parent=1 // pred_fallthru
      _
    %v62 = vld [vmem:[%s0] sm:$0xff]
    %v63 = vld [vmem:[%s0 + $0x8] sm:$0xff]
    %v64 = vpack.c.bf16 %v62, %v62
    %v65 = vpack.c.bf16 %v63, %v63
    %v66 = vld [vmem:[#allocation2] sm:$0xff]
    %v67 = vld [vmem:[#allocation2 + $0x8] sm:$0xff]
    %v68 = vld [vmem:[#allocation2 + $0x10] sm:$0xff]
    %v69 = vld [vmem:[#allocation2 + $0x18] sm:$0xff]
    %v70 = vld [vmem:[#allocation2 + $0x20] sm:$0xff]
    %v71 = vld [vmem:[#allocation2 + $0x28] sm:$0xff]
    %v72 = vld [vmem:[#allocation2 + $0x30] sm:$0xff]
    %v73 = vld [vmem:[#allocation2 + $0x38] sm:$0xff]
    %v74 = vld [vmem:[#allocation2 + $0x40] sm:$0xff]
    %v75 = vld [vmem:[#allocation2 + $0x48] sm:$0xff]
    %v76 = vld [vmem:[#allocation2 + $0x50] sm:$0xff]
    %v77 = vld [vmem:[#allocation2 + $0x58] sm:$0xff]
    %v78 = vld [vmem:[#allocation2 + $0x60] sm:$0xff]
    %v79 = vld [vmem:[#allocation2 + $0x68] sm:$0xff]
    %v80 = vld [vmem:[#allocation2 + $0x70] sm:$0xff]
    %v81 = vld [vmem:[#allocation2 + $0x78] sm:$0xff]
    %v82 = vld [vmem:[#allocation2 + $0x80] sm:$0xff]
    %v83 = vld [vmem:[#allocation2 + $0x88] sm:$0xff]
    %v84 = vld [vmem:[#allocation2 + $0x90] sm:$0xff]
    %v85 = vld [vmem:[#allocation2 + $0x98] sm:$0xff]
    %v86 = vld [vmem:[#allocation2 + $0xa0] sm:$0xff]
    %v87 = vld [vmem:[#allocation2 + $0xa8] sm:$0xff]
    %v88 = vld [vmem:[#allocation2 + $0xb0] sm:$0xff]
    %v89 = vld [vmem:[#allocation2 + $0xb8] sm:$0xff]
    %v90 = vld [vmem:[%s4] ss:$8 sm:$0x3]
    %v92 = vlaneseq
    %v93 = vshrl.u32 %v92, 7
    %v94 = vsub.s32 0, %v93
    %v95 = vrot.slane %v90, %v94
    %v96 = vlaneseq
    %v97 = vshrl.u32 %v96, 7
    %v98 = vsub.s32 1, %v97
    %v99 = vrot.slane %v90, %v98
    %v126 = vunpack.c.l.b16 %v66
    %v127 = vunpack.c.h.b16 %v66
    %v128 = vunpack.c.l.b16 %v67
    %v129 = vunpack.c.h.b16 %v67
    %v130 = vunpack.c.l.b16 %v68
    %v131 = vunpack.c.h.b16 %v68
    %v132 = vunpack.c.l.b16 %v69
    %v133 = vunpack.c.h.b16 %v69
    %v134 = vunpack.c.l.b16 %v70
    %v135 = vunpack.c.h.b16 %v70
    %v136 = vunpack.c.l.b16 %v71
    %v137 = vunpack.c.h.b16 %v71
    %v138 = vunpack.c.l.b16 %v72
    %v139 = vunpack.c.h.b16 %v72
    %v140 = vunpack.c.l.b16 %v73
    %v141 = vunpack.c.h.b16 %v73
    %v142 = vunpack.c.l.b16 %v74
    %v143 = vunpack.c.h.b16 %v74
    %v144 = vunpack.c.l.b16 %v75
    %v145 = vunpack.c.h.b16 %v75
    %v146 = vunpack.c.l.b16 %v76
    %v147 = vunpack.c.h.b16 %v76
    %v148 = vunpack.c.l.b16 %v77
    %v149 = vunpack.c.h.b16 %v77
    %v150 = vunpack.c.l.b16 %v78
    %v151 = vunpack.c.h.b16 %v78
    %v152 = vunpack.c.l.b16 %v79
    %v153 = vunpack.c.h.b16 %v79
    %v154 = vunpack.c.l.b16 %v80
    %v155 = vunpack.c.h.b16 %v80
    %v156 = vunpack.c.l.b16 %v81
    %v157 = vunpack.c.h.b16 %v81
    %v158 = vunpack.c.l.b16 %v82
    %v159 = vunpack.c.h.b16 %v82
    %v160 = vunpack.c.l.b16 %v83
    %v161 = vunpack.c.h.b16 %v83
    %v162 = vunpack.c.l.b16 %v84
    %v163 = vunpack.c.h.b16 %v84
    %v164 = vunpack.c.l.b16 %v85
    %v165 = vunpack.c.h.b16 %v85
    %v166 = vunpack.c.l.b16 %v86
    %v167 = vunpack.c.h.b16 %v86
    %v168 = vunpack.c.l.b16 %v87
    %v169 = vunpack.c.h.b16 %v87
    %v170 = vunpack.c.l.b16 %v88
    %v171 = vunpack.c.h.b16 %v88
    %v172 = vunpack.c.l.b16 %v89
    %v173 = vunpack.c.h.b16 %v89
    %v174 = vpack.c.b16 %v128, %v126
    %v175 = vpack.c.b16 %v129, %v127
    %v176 = vpack.c.b16 %v132, %v130
    %v177 = vpack.c.b16 %v133, %v131
    %v178 = vpack.c.b16 %v136, %v134
    %v179 = vpack.c.b16 %v137, %v135
    %v180 = vpack.c.b16 %v140, %v138
    %v181 = vpack.c.b16 %v141, %v139
    %v182 = vpack.c.b16 %v144, %v142
    %v183 = vpack.c.b16 %v145, %v143
    %v184 = vpack.c.b16 %v148, %v146
    %v185 = vpack.c.b16 %v149, %v147
    %v186 = vpack.c.b16 %v152, %v150
    %v187 = vpack.c.b16 %v153, %v151
    %v188 = vpack.c.b16 %v156, %v154
    %v189 = vpack.c.b16 %v157, %v155
    %v190 = vpack.c.b16 %v160, %v158
    %v191 = vpack.c.b16 %v161, %v159
    %v192 = vpack.c.b16 %v164, %v162
    %v193 = vpack.c.b16 %v165, %v163
    %v194 = vpack.c.b16 %v168, %v166
    %v195 = vpack.c.b16 %v169, %v167
    %v196 = vpack.c.b16 %v172, %v170
    %v197 = vpack.c.b16 %v173, %v171
    %vm222 = vcmask 523264
    %v224 = vsel %vm222, %v65, 0
    %226 = vmatprep.subr.bf16.mxu0 %v175
    %227 = vmatpush1.bf16.msra.mxu0 %v174
    %228 = vmatprep.subr.bf16.mxu0 %v177
    %229 = vmatpush1.bf16.msra.mxu0 %v176
    %230 = vmatprep.subr.bf16.mxu0 %v179
    %231 = vmatpush1.bf16.msra.mxu0 %v178
    %232 = vmatprep.subr.bf16.mxu0 %v181
    %233 = vmatpush1.bf16.msra.mxu0 %v180
    %234 = vmatprep.subr.bf16.mxu0 %v183
    %235 = vmatpush1.bf16.msra.mxu0 %v182
    %236 = vmatprep.subr.bf16.mxu0 %v185
    %237 = vmatpush1.bf16.msra.mxu0 %v184
    %238 = vmatprep.subr.bf16.mxu0 %v187
    %239 = vmatpush1.bf16.msra.mxu0 %v186
    %240 = vmatprep.subr.bf16.mxu0 %v189
    %241 = vmatpush1.bf16.msra.mxu0 %v188
    %242 = vmatprep.subr.bf16.mxu0 %v191
    %243 = vmatpush1.bf16.msra.mxu0 %v190
    %244 = vmatprep.subr.bf16.mxu0 %v193
    %245 = vmatpush1.bf16.msra.mxu0 %v192
    %246 = vmatprep.subr.bf16.mxu0 %v195
    %247 = vmatpush1.bf16.msra.mxu0 %v194
    %248 = vmatprep.subr.bf16.mxu0 %v197
    %249 = vmatpush1.bf16.msra.mxu0 %v196
    %250 = vmatprep.subr.bf16.mxu0 0
    %251 = vmatpush1.bf16.msra.mxu0 0
    %252 = vmatprep.subr.bf16.mxu0 0
    %253 = vmatpush1.bf16.msra.mxu0 0
    %254 = vmatprep.subr.bf16.mxu0 0
    %255 = vmatpush1.bf16.msra.mxu0 0
    %256 = vmatprep.subr.bf16.mxu0 0
    %257 = vmatpush1.bf16.msra.mxu0 0
    %258 = vmatprep.mubr.bf16.mxu0 %v224
    %259 = vmatmul.mubr.bf16.gmra.mrb[0].mxu0 %v64
    %v260 = vpop.f32.mrb[0].mxu0
    %v261 = vadd.f32 %v95, %v260
    %v262 = vpop.f32.mrb[0].mxu0
    %v263 = vadd.f32 %v99, %v262
    %v264 = vpop.f32.mrb[0].mxu0
    %v265 = vpop.f32.mrb[0].mxu0
    %266 = vdwg.mxu0
    %v267 = vmax.f32 %v261, 0.0
    %v268 = vmax.f32 %v263, 0.0
    %v269 = vpack.c.bf16 %v267, %v267
    %v270 = vpack.c.bf16 %v268, %v268
    %v271 = vld [vmem:[#allocation4] sm:$0xff]
    %v272 = vld [vmem:[#allocation4 + $0x8] sm:$0xff]
    %v273 = vld [vmem:[#allocation4 + $0x10] sm:$0xff]
    %v274 = vld [vmem:[#allocation4 + $0x18] sm:$0xff]
    %v275 = vld [vmem:[#allocation4 + $0x20] sm:$0xff]
    %v276 = vld [vmem:[#allocation4 + $0x28] sm:$0xff]
    %v277 = vld [vmem:[#allocation4 + $0x30] sm:$0xff]
    %v278 = vld [vmem:[#allocation4 + $0x38] sm:$0xff]
    %v279 = vld [vmem:[#allocation4 + $0x40] sm:$0xff]
    %v280 = vld [vmem:[#allocation4 + $0x48] sm:$0xff]
    %v281 = vld [vmem:[#allocation4 + $0x50] sm:$0xff]
    %v282 = vld [vmem:[#allocation4 + $0x58] sm:$0xff]
    %v283 = vld [vmem:[#allocation4 + $0x60] sm:$0xff]
    %v284 = vld [vmem:[#allocation4 + $0x68] sm:$0xff]
    %v285 = vld [vmem:[#allocation4 + $0x70] sm:$0xff]
    %v286 = vld [vmem:[#allocation4 + $0x78] sm:$0xff]
    %v287 = vld [vmem:[#allocation4 + $0x80] sm:$0xff]
    %v288 = vld [vmem:[#allocation4 + $0x88] sm:$0xff]
    %v289 = vld [vmem:[#allocation4 + $0x90] sm:$0xff]
    %v290 = vld [vmem:[#allocation4 + $0x98] sm:$0xff]
    %v291 = vld [vmem:[#allocation4 + $0xa0] sm:$0xff]
    %v292 = vld [vmem:[#allocation4 + $0xa8] sm:$0xff]
    %v293 = vld [vmem:[#allocation4 + $0xb0] sm:$0xff]
    %v294 = vld [vmem:[#allocation4 + $0xb8] sm:$0xff]
    %v295 = vld [vmem:[#allocation4 + $0xc0] sm:$0xff]
    %v296 = vld [vmem:[#allocation4 + $0xc8] sm:$0xff]
    %v297 = vld [vmem:[#allocation4 + $0xd0] sm:$0xff]
    %v298 = vld [vmem:[#allocation4 + $0xd8] sm:$0xff]
    %v299 = vld [vmem:[#allocation4 + $0xe0] sm:$0xff]
    %v300 = vld [vmem:[#allocation4 + $0xe8] sm:$0xff]
    %v301 = vld [vmem:[#allocation4 + $0xf0] sm:$0xff]
    %v302 = vld [vmem:[#allocation4 + $0xf8] sm:$0xff]
    %s303 = scalar_lea.vmem %s4, 1
    %v304 = vld [vmem:[%s303] ss:$8 sm:$0x3]
    %v306 = vlaneseq
    %v307 = vshrl.u32 %v306, 7
    %v308 = vsub.s32 0, %v307
    %v309 = vrot.slane %v304, %v308
    %v310 = vlaneseq
    %v311 = vshrl.u32 %v310, 7
    %v312 = vsub.s32 1, %v311
    %v313 = vrot.slane %v304, %v312
    %v348 = vunpack.c.l.b16 %v271
    %v349 = vunpack.c.h.b16 %v271
    %v350 = vunpack.c.l.b16 %v272
    %v351 = vunpack.c.h.b16 %v272
    %v352 = vunpack.c.l.b16 %v273
    %v353 = vunpack.c.h.b16 %v273
    %v354 = vunpack.c.l.b16 %v274
    %v355 = vunpack.c.h.b16 %v274
    %v356 = vunpack.c.l.b16 %v275
    %v357 = vunpack.c.h.b16 %v275
    %v358 = vunpack.c.l.b16 %v276
    %v359 = vunpack.c.h.b16 %v276
    %v360 = vunpack.c.l.b16 %v277
    %v361 = vunpack.c.h.b16 %v277
    %v362 = vunpack.c.l.b16 %v278
    %v363 = vunpack.c.h.b16 %v278
    %v364 = vunpack.c.l.b16 %v279
    %v365 = vunpack.c.h.b16 %v279
    %v366 = vunpack.c.l.b16 %v280
    %v367 = vunpack.c.h.b16 %v280
    %v368 = vunpack.c.l.b16 %v281
    %v369 = vunpack.c.h.b16 %v281
    %v370 = vunpack.c.l.b16 %v282
    %v371 = vunpack.c.h.b16 %v282
    %v372 = vunpack.c.l.b16 %v283
    %v373 = vunpack.c.h.b16 %v283
    %v374 = vunpack.c.l.b16 %v284
    %v375 = vunpack.c.h.b16 %v284
    %v376 = vunpack.c.l.b16 %v285
    %v377 = vunpack.c.h.b16 %v285
    %v378 = vunpack.c.l.b16 %v286
    %v379 = vunpack.c.h.b16 %v286
    %v380 = vunpack.c.l.b16 %v287
    %v381 = vunpack.c.h.b16 %v287
    %v382 = vunpack.c.l.b16 %v288
    %v383 = vunpack.c.h.b16 %v288
    %v384 = vunpack.c.l.b16 %v289
    %v385 = vunpack.c.h.b16 %v289
    %v386 = vunpack.c.l.b16 %v290
    %v387 = vunpack.c.h.b16 %v290
    %v388 = vunpack.c.l.b16 %v291
    %v389 = vunpack.c.h.b16 %v291
    %v390 = vunpack.c.l.b16 %v292
    %v391 = vunpack.c.h.b16 %v292
    %v392 = vunpack.c.l.b16 %v293
    %v393 = vunpack.c.h.b16 %v293
    %v394 = vunpack.c.l.b16 %v294
    %v395 = vunpack.c.h.b16 %v294
    %v396 = vunpack.c.l.b16 %v295
    %v397 = vunpack.c.h.b16 %v295
    %v398 = vunpack.c.l.b16 %v296
    %v399 = vunpack.c.h.b16 %v296
    %v400 = vunpack.c.l.b16 %v297
    %v401 = vunpack.c.h.b16 %v297
    %v402 = vunpack.c.l.b16 %v298
    %v403 = vunpack.c.h.b16 %v298
    %v404 = vunpack.c.l.b16 %v299
    %v405 = vunpack.c.h.b16 %v299
    %v406 = vunpack.c.l.b16 %v300
    %v407 = vunpack.c.h.b16 %v300
    %v408 = vunpack.c.l.b16 %v301
    %v409 = vunpack.c.h.b16 %v301
    %v410 = vunpack.c.l.b16 %v302
    %v411 = vunpack.c.h.b16 %v302
    %v412 = vpack.c.b16 %v350, %v348
    %v413 = vpack.c.b16 %v351, %v349
    %v414 = vpack.c.b16 %v354, %v352
    %v415 = vpack.c.b16 %v355, %v353
    %v416 = vpack.c.b16 %v358, %v356
    %v417 = vpack.c.b16 %v359, %v357
    %v418 = vpack.c.b16 %v362, %v360
    %v419 = vpack.c.b16 %v363, %v361
    %v420 = vpack.c.b16 %v366, %v364
    %v421 = vpack.c.b16 %v367, %v365
    %v422 = vpack.c.b16 %v370, %v368
    %v423 = vpack.c.b16 %v371, %v369
    %v424 = vpack.c.b16 %v374, %v372
    %v425 = vpack.c.b16 %v375, %v373
    %v426 = vpack.c.b16 %v378, %v376
    %v427 = vpack.c.b16 %v379, %v377
    %v428 = vpack.c.b16 %v382, %v380
    %v429 = vpack.c.b16 %v383, %v381
    %v430 = vpack.c.b16 %v386, %v384
    %v431 = vpack.c.b16 %v387, %v385
    %v432 = vpack.c.b16 %v390, %v388
    %v433 = vpack.c.b16 %v391, %v389
    %v434 = vpack.c.b16 %v394, %v392
    %v435 = vpack.c.b16 %v395, %v393
    %v436 = vpack.c.b16 %v398, %v396
    %v437 = vpack.c.b16 %v399, %v397
    %v438 = vpack.c.b16 %v402, %v400
    %v439 = vpack.c.b16 %v403, %v401
    %v440 = vpack.c.b16 %v406, %v404
    %v441 = vpack.c.b16 %v407, %v405
    %v442 = vpack.c.b16 %v410, %v408
    %v443 = vpack.c.b16 %v411, %v409
    %476 = vmatprep.subr.bf16.mxu0 %v413
    %477 = vmatpush1.bf16.msra.mxu0 %v412
    %478 = vmatprep.subr.bf16.mxu0 %v415
    %479 = vmatpush1.bf16.msra.mxu0 %v414
    %480 = vmatprep.subr.bf16.mxu0 %v417
    %481 = vmatpush1.bf16.msra.mxu0 %v416
    %482 = vmatprep.subr.bf16.mxu0 %v419
    %483 = vmatpush1.bf16.msra.mxu0 %v418
    %484 = vmatprep.subr.bf16.mxu0 %v421
    %485 = vmatpush1.bf16.msra.mxu0 %v420
    %486 = vmatprep.subr.bf16.mxu0 %v423
    %487 = vmatpush1.bf16.msra.mxu0 %v422
    %488 = vmatprep.subr.bf16.mxu0 %v425
    %489 = vmatpush1.bf16.msra.mxu0 %v424
    %490 = vmatprep.subr.bf16.mxu0 %v427
    %491 = vmatpush1.bf16.msra.mxu0 %v426
    %492 = vmatprep.subr.bf16.mxu0 %v429
    %493 = vmatpush1.bf16.msra.mxu0 %v428
    %494 = vmatprep.subr.bf16.mxu0 %v431
    %495 = vmatpush1.bf16.msra.mxu0 %v430
    %496 = vmatprep.subr.bf16.mxu0 %v433
    %497 = vmatpush1.bf16.msra.mxu0 %v432
    %498 = vmatprep.subr.bf16.mxu0 %v435
    %499 = vmatpush1.bf16.msra.mxu0 %v434
    %500 = vmatprep.subr.bf16.mxu0 %v437
    %501 = vmatpush1.bf16.msra.mxu0 %v436
    %502 = vmatprep.subr.bf16.mxu0 %v439
    %503 = vmatpush1.bf16.msra.mxu0 %v438
    %504 = vmatprep.subr.bf16.mxu0 %v441
    %505 = vmatpush1.bf16.msra.mxu0 %v440
    %506 = vmatprep.subr.bf16.mxu0 %v443
    %507 = vmatpush1.bf16.msra.mxu0 %v442
    %508 = vmatprep.mubr.bf16.mxu0 %v270
    %509 = vmatmul.mubr.bf16.gmra.mrb[0].mxu0 %v269
    %v510 = vpop.f32.mrb[0].mxu0
    %v511 = vadd.f32 %v309, %v510
    %v512 = vpop.f32.mrb[0].mxu0
    %v513 = vadd.f32 %v313, %v512
    %v514 = vpop.f32.mrb[0].mxu0
    %v515 = vpop.f32.mrb[0].mxu0
    %516 = vdwg.mxu0
    %v517 = vmax.f32 %v511, 0.0
    %v518 = vmax.f32 %v513, 0.0
    %v519 = vpack.c.bf16 %v517, %v517
    %v520 = vpack.c.bf16 %v518, %v518
    %v521 = vld [vmem:[#allocation6] sm:$0xf]
    %v522 = vld [vmem:[#allocation6 + $0x4] sm:$0xf]
    %v523 = vld [vmem:[#allocation6 + $0x8] sm:$0xf]
    %v524 = vld [vmem:[#allocation6 + $0xc] sm:$0xf]
    %v525 = vld [vmem:[#allocation6 + $0x10] sm:$0xf]
    %v526 = vld [vmem:[#allocation6 + $0x14] sm:$0xf]
    %v527 = vld [vmem:[#allocation6 + $0x18] sm:$0xf]
    %v528 = vld [vmem:[#allocation6 + $0x1c] sm:$0xf]
    %v529 = vld [vmem:[#allocation6 + $0x20] sm:$0xf]
    %v530 = vld [vmem:[#allocation6 + $0x24] sm:$0xf]
    %v531 = vld [vmem:[#allocation6 + $0x28] sm:$0xf]
    %v532 = vld [vmem:[#allocation6 + $0x2c] sm:$0xf]
    %v533 = vld [vmem:[#allocation6 + $0x30] sm:$0xf]
    %v534 = vld [vmem:[#allocation6 + $0x34] sm:$0xf]
    %v535 = vld [vmem:[#allocation6 + $0x38] sm:$0xf]
    %v536 = vld [vmem:[#allocation6 + $0x3c] sm:$0xf]
    %v537 = vld [vmem:[#allocation6 + $0x40] sm:$0xf]
    %v538 = vld [vmem:[#allocation6 + $0x44] sm:$0xf]
    %v539 = vld [vmem:[#allocation6 + $0x48] sm:$0xf]
    %v540 = vld [vmem:[#allocation6 + $0x4c] sm:$0xf]
    %v541 = vld [vmem:[#allocation6 + $0x50] sm:$0xf]
    %v542 = vld [vmem:[#allocation6 + $0x54] sm:$0xf]
    %v543 = vld [vmem:[#allocation6 + $0x58] sm:$0xf]
    %v544 = vld [vmem:[#allocation6 + $0x5c] sm:$0xf]
    %v545 = vld [vmem:[#allocation6 + $0x60] sm:$0xf]
    %v546 = vld [vmem:[#allocation6 + $0x64] sm:$0xf]
    %v547 = vld [vmem:[#allocation6 + $0x68] sm:$0xf]
    %v548 = vld [vmem:[#allocation6 + $0x6c] sm:$0xf]
    %v549 = vld [vmem:[#allocation6 + $0x70] sm:$0xf]
    %v550 = vld [vmem:[#allocation6 + $0x74] sm:$0xf]
    %v551 = vld [vmem:[#allocation6 + $0x78] sm:$0xf]
    %v552 = vld [vmem:[#allocation6 + $0x7c] sm:$0xf]
    %v553 = vld [vmem:[%s4 + $0x2] ss:$0 sm:$0xff]
    %v586 = vunpack.c.l.b16 %v521
    %v587 = vunpack.c.l.b16 %v522
    %v588 = vunpack.c.l.b16 %v523
    %v589 = vunpack.c.l.b16 %v524
    %v590 = vunpack.c.l.b16 %v525
    %v591 = vunpack.c.l.b16 %v526
    %v592 = vunpack.c.l.b16 %v527
    %v593 = vunpack.c.l.b16 %v528
    %v594 = vunpack.c.l.b16 %v529
    %v595 = vunpack.c.l.b16 %v530
    %v596 = vunpack.c.l.b16 %v531
    %v597 = vunpack.c.l.b16 %v532
    %v598 = vunpack.c.l.b16 %v533
    %v599 = vunpack.c.l.b16 %v534
    %v600 = vunpack.c.l.b16 %v535
    %v601 = vunpack.c.l.b16 %v536
    %v602 = vunpack.c.l.b16 %v537
    %v603 = vunpack.c.l.b16 %v538
    %v604 = vunpack.c.l.b16 %v539
    %v605 = vunpack.c.l.b16 %v540
    %v606 = vunpack.c.l.b16 %v541
    %v607 = vunpack.c.l.b16 %v542
    %v608 = vunpack.c.l.b16 %v543
    %v609 = vunpack.c.l.b16 %v544
    %v610 = vunpack.c.l.b16 %v545
    %v611 = vunpack.c.l.b16 %v546
    %v612 = vunpack.c.l.b16 %v547
    %v613 = vunpack.c.l.b16 %v548
    %v614 = vunpack.c.l.b16 %v549
    %v615 = vunpack.c.l.b16 %v550
    %v616 = vunpack.c.l.b16 %v551
    %v617 = vunpack.c.l.b16 %v552
    %v618 = vpack.c.b16 %v587, %v586
    %v619 = vpack.c.b16 %v589, %v588
    %v620 = vpack.c.b16 %v591, %v590
    %v621 = vpack.c.b16 %v593, %v592
    %v622 = vpack.c.b16 %v595, %v594
    %v623 = vpack.c.b16 %v597, %v596
    %v624 = vpack.c.b16 %v599, %v598
    %v625 = vpack.c.b16 %v601, %v600
    %v626 = vpack.c.b16 %v603, %v602
    %v627 = vpack.c.b16 %v605, %v604
    %v628 = vpack.c.b16 %v607, %v606
    %v629 = vpack.c.b16 %v609, %v608
    %v630 = vpack.c.b16 %v611, %v610
    %v631 = vpack.c.b16 %v613, %v612
    %v632 = vpack.c.b16 %v615, %v614
    %v633 = vpack.c.b16 %v617, %v616
    %650 = vmatprep.subr.bf16.mxu0 0
    %651 = vmatpush1.bf16.msra.mxu0 %v618
    %652 = vmatprep.subr.bf16.mxu0 0
    %653 = vmatpush1.bf16.msra.mxu0 %v619
    %654 = vmatprep.subr.bf16.mxu0 0
    %655 = vmatpush1.bf16.msra.mxu0 %v620
    %656 = vmatprep.subr.bf16.mxu0 0
    %657 = vmatpush1.bf16.msra.mxu0 %v621
    %658 = vmatprep.subr.bf16.mxu0 0
    %659 = vmatpush1.bf16.msra.mxu0 %v622
    %660 = vmatprep.subr.bf16.mxu0 0
    %661 = vmatpush1.bf16.msra.mxu0 %v623
    %662 = vmatprep.subr.bf16.mxu0 0
    %663 = vmatpush1.bf16.msra.mxu0 %v624
    %664 = vmatprep.subr.bf16.mxu0 0
    %665 = vmatpush1.bf16.msra.mxu0 %v625
    %666 = vmatprep.subr.bf16.mxu0 0
    %667 = vmatpush1.bf16.msra.mxu0 %v626
    %668 = vmatprep.subr.bf16.mxu0 0
    %669 = vmatpush1.bf16.msra.mxu0 %v627
    %670 = vmatprep.subr.bf16.mxu0 0
    %671 = vmatpush1.bf16.msra.mxu0 %v628
    %672 = vmatprep.subr.bf16.mxu0 0
    %673 = vmatpush1.bf16.msra.mxu0 %v629
    %674 = vmatprep.subr.bf16.mxu0 0
    %675 = vmatpush1.bf16.msra.mxu0 %v630
    %676 = vmatprep.subr.bf16.mxu0 0
    %677 = vmatpush1.bf16.msra.mxu0 %v631
    %678 = vmatprep.subr.bf16.mxu0 0
    %679 = vmatpush1.bf16.msra.mxu0 %v632
    %680 = vmatprep.subr.bf16.mxu0 0
    %681 = vmatpush1.bf16.msra.mxu0 %v633
    %682 = vmatprep.mubr.bf16.mxu0 %v520
    %683 = vmatmul.mubr.bf16.gmra.mrb[0].mxu0 %v519
    %v684 = vpop.f32.mrb[0].mxu0
    %v685 = vadd.f32 %v553, %v684
    %v686 = vpop.f32.mrb[0].mxu0
    %v687 = vpop.f32.mrb[0].mxu0
    %v688 = vpop.f32.mrb[0].mxu0
    %689 = vdwg.mxu0
    %690 = vst [vmem:[%s5] sm:$0xff] %v685
    // Predicated region
    $region34: #{mymodel_forward.1} parent=1 // pred_check
      _
    $region35: #{mymodel_forward.1} parent=1 // pred_check_branch
      %692 = sbr.rel (0) target = $region37
    $region36: #{mymodel_forward.1} parent=1 // pred_region
      _
    $region37: #{mymodel_forward.1} parent=1 // pred_fallthru
      _
    // Predicated region
    $region38: #{mymodel_forward.1} parent=1 // pred_check
      _
    $region39: #{mymodel_forward.1} parent=1 // pred_check_branch
      %694 = sbr.rel (0) target = $region41
    $region40: #{mymodel_forward.1} parent=1 // pred_region
      _
    $region41: #{mymodel_forward.1} parent=1 // pred_fallthru
      _
    %695 = vsyncpa [#allocation3], 1
    %696 = vsyncpa [#allocation5], 1

</llo_original>
